<compile_context>
chip_gen: v5e
topology: v5e:2x2
jax: 0.10.0
libtpu: 0.0.40
codegen_flags: <defaults>
</compile_context>

<pallas_src>
import functools

import jax
import jax.numpy as jnp
from jax.experimental import pallas as pl
from jax.experimental.pallas import tpu as pltpu


def _round_up(n, m):
    return ((n + m - 1) // m) * m


def _attribute_network_kernel(x_ref, w1_ref, b1_ref, w2_ref, b2_ref, o_ref, h_ref):
    # Hidden layer: relu(x @ W1 + b1), f32 accumulate, staged in VMEM scratch.
    h = jnp.dot(x_ref[...], w1_ref[...], preferred_element_type=jnp.float32)
    h_ref[...] = jnp.maximum(h + b1_ref[...], 0.0)
    # Output layer: relu(h @ W2 + b2), f32 accumulate, f32 epilogue.
    hh = h_ref[...].astype(w2_ref.dtype)
    y = jnp.dot(hh, w2_ref[...], preferred_element_type=jnp.float32)
    o_ref[...] = jnp.maximum(y + b2_ref[...], 0.0).astype(o_ref.dtype)


def attribute_network(x, w1, b1, w2, b2, *, block_b=256, compute_dtype=None):
    """Pallas forward for AttributeNetwork.

    x  : (B, input_size)        float32
    w1 : (input_size, hidden)   float32   (transposed vs. PyTorch's (out, in))
    b1 : (hidden,) or (1, hidden)
    w2 : (hidden, output)       float32   (transposed vs. PyTorch's (out, in))
    b2 : (output,) or (1, output)
    compute_dtype : None (keep f32) or jnp.bfloat16 for the MXU inputs
                    (accumulation and bias/ReLU stay in float32).
    returns (B, output)         float32
    """
    B, in_size = x.shape
    hid = w1.shape[1]
    out = w2.shape[1]

    # ---- lane-dense padding (exact for Linear -> ReLU) ------------------------
    hid_p = _round_up(hid, 128)
    out_p = _round_up(out, 128)
    w1p = jnp.pad(w1, ((0, 0), (0, hid_p - hid)))
    b1p = jnp.pad(jnp.reshape(b1, (1, -1)).astype(jnp.float32),
                  ((0, 0), (0, hid_p - hid)))
    w2p = jnp.pad(w2, ((0, hid_p - hid), (0, out_p - out)))
    b2p = jnp.pad(jnp.reshape(b2, (1, -1)).astype(jnp.float32),
                  ((0, 0), (0, out_p - out)))

    # ---- optional bf16 MXU inputs (v6e / v7x) ---------------------------------
    xc = x
    if compute_dtype is not None:
        xc = x.astype(compute_dtype)
        w1p = w1p.astype(compute_dtype)
        w2p = w2p.astype(compute_dtype)

    # ---- batch tiling ---------------------------------------------------------
    block_b = _round_up(block_b, 8)
    B8 = _round_up(B, 8)
    single_tile = B8 <= block_b
    TB = B8 if single_tile else block_b
    Bp = B8 if single_tile else _round_up(B, TB)
    if Bp != B:
        xc = jnp.pad(xc, ((0, Bp - B), (0, 0)))

    itemsize = jnp.dtype(xc.dtype).itemsize
    cost = pl.CostEstimate(
        flops=int(2 * Bp * (in_size * hid_p + hid_p * out_p)),
        transcendentals=0,
        bytes_accessed=int(
            Bp * in_size * itemsize
            + w1p.size * itemsize + w2p.size * itemsize
            + b1p.size * 4 + b2p.size * 4
            + Bp * out_p * 4
        ),
    )

    out_shape = jax.ShapeDtypeStruct((Bp, out_p), jnp.float32)
    scratch_shapes = [pltpu.VMEM((TB, hid_p), jnp.float32)]

    if single_tile:
        # Tiny problem: no grid, everything as a single full-array VMEM block.
        vmem_spec = pl.BlockSpec(memory_space=pltpu.MemorySpace.VMEM)
        y = pl.pallas_call(
            _attribute_network_kernel,
            out_shape=out_shape,
            in_specs=[vmem_spec] * 5,
            out_specs=vmem_spec,
            scratch_shapes=scratch_shapes,
            cost_estimate=cost,
        )(xc, w1p, b1p, w2p, b2p)
    else:
        # Real batch: tile the batch, keep the (small) weights resident across tiles.
        grid = (Bp // TB,)
        y = pl.pallas_call(
            _attribute_network_kernel,
            out_shape=out_shape,
            grid=grid,
            in_specs=[
                pl.BlockSpec((TB, in_size), lambda i: (i, 0)),     # x: per-tile
                pl.BlockSpec((in_size, hid_p), lambda i: (0, 0)),  # W1: resident
                pl.BlockSpec((1, hid_p), lambda i: (0, 0)),        # b1: resident
                pl.BlockSpec((hid_p, out_p), lambda i: (0, 0)),    # W2: resident
                pl.BlockSpec((1, out_p), lambda i: (0, 0)),        # b2: resident
            ],
            out_specs=pl.BlockSpec((TB, out_p), lambda i: (i, 0)),
            scratch_shapes=scratch_shapes,
            compiler_params=pltpu.CompilerParams(
                dimension_semantics=("parallel",),  # shards across TCs on v7x
            ),
            cost_estimate=cost,
        )(xc, w1p, b1p, w2p, b2p)

    return y[:B, :out]


def reference_forward(x, w1, b1, w2, b2):
    h = jnp.maximum(x @ w1 + jnp.reshape(b1, (1, -1)), 0.0)
    return jnp.maximum(h @ w2 + jnp.reshape(b2, (1, -1)), 0.0)


if __name__ == "__main__":
    # Shapes consistent with the module: batch=8, input=32, hidden=64, output=48.
    B, input_size, hidden_size, output_size = 8, 32, 64, 48

    key = jax.random.PRNGKey(0)
    kx, kw1, kb1, kw2, kb2, kxl = jax.random.split(key, 6)

    x = jax.random.normal(kx, (B, input_size), dtype=jnp.float32)
    # PyTorch nn.Linear stores weight as (out, in); we pre-transpose to (in, out).
    w1 = jax.random.normal(kw1, (input_size, hidden_size), dtype=jnp.float32) * 0.1
    b1 = jax.random.normal(kb1, (1, hidden_size), dtype=jnp.float32) * 0.1
    w2 = jax.random.normal(kw2, (hidden_size, output_size), dtype=jnp.float32) * 0.1
    b2 = jax.random.normal(kb2, (1, output_size), dtype=jnp.float32) * 0.1

    ref = reference_forward(x, w1, b1, w2, b2)

    # 1) Small batch, f32 path (single-tile, no grid).
    out = jax.block_until_ready(attribute_network(x, w1, b1, w2, b2))
    assert out.shape == (B, output_size)
    assert jnp.allclose(out, ref, atol=1e-5, rtol=1e-5), "f32 small-batch mismatch"

    # 2) Larger batch, f32 path (batch-tiled grid, resident weights).
    BL = 512
    xl = jax.random.normal(kxl, (BL, input_size), dtype=jnp.float32)
    ref_l = reference_forward(xl, w1, b1, w2, b2)
    out_l = jax.block_until_ready(attribute_network(xl, w1, b1, w2, b2, block_b=256))
    assert out_l.shape == (BL, output_size)
    assert jnp.allclose(out_l, ref_l, atol=1e-4, rtol=1e-4), "f32 tiled mismatch"

    # 3) Larger batch, bf16 MXU inputs (f32 accumulate) — looser tolerance.
    out_bf = jax.block_until_ready(
        attribute_network(xl, w1, b1, w2, b2, block_b=256, compute_dtype=jnp.bfloat16)
    )
    assert out_bf.shape == (BL, output_size)
    assert jnp.allclose(out_bf, ref_l, atol=5e-2, rtol=5e-2), "bf16 tiled mismatch"

    print("KERNEL_OK")
</pallas_src>

<mosaic_0001>
module attributes {stable_mosaic.version = 11 : i64} {
  func.func @_attribute_network_kernel(%arg0: memref<8x32xf32, #tpu.memory_space<vmem>>, %arg1: memref<32x128xf32, #tpu.memory_space<vmem>>, %arg2: memref<1x128xf32, #tpu.memory_space<vmem>>, %arg3: memref<128x128xf32, #tpu.memory_space<vmem>>, %arg4: memref<1x128xf32, #tpu.memory_space<vmem>>, %arg5: memref<8x128xf32, #tpu.memory_space<vmem>>, %arg6: memref<8x128xf32, #tpu.memory_space<vmem>>) attributes {dimension_semantics = [], scalar_prefetch = 0 : i64, scratch_operands = 1 : i64, tpu.core_type = #tpu.core_type<tc>} {
    %c0 = arith.constant 0 : index
    %c0_0 = arith.constant 0 : index
    %0 = vector.load %arg0[%c0, %c0_0] : memref<8x32xf32, #tpu.memory_space<vmem>>, vector<8x32xf32>
    %c0_1 = arith.constant 0 : index
    %c0_2 = arith.constant 0 : index
    %1 = vector.load %arg1[%c0_1, %c0_2] : memref<32x128xf32, #tpu.memory_space<vmem>>, vector<32x128xf32>
    %cst = arith.constant dense<0.000000e+00> : vector<8x128xf32>
    %2 = tpu.matmul %0, %1, %cst {dimension_numbers = #tpu.dot_dimension_numbers<[1], [0], [0], [1], [0, 0, 1, 1], [], []>} : vector<8x32xf32>, vector<32x128xf32>, vector<8x128xf32> -> vector<8x128xf32>
    %c0_3 = arith.constant 0 : index
    %c0_4 = arith.constant 0 : index
    %3 = vector.load %arg2[%c0_3, %c0_4] : memref<1x128xf32, #tpu.memory_space<vmem>>, vector<1x128xf32>
    %4 = vector.broadcast %3 : vector<1x128xf32> to vector<8x128xf32>
    %5 = arith.addf %2, %4 : vector<8x128xf32>
    %cst_5 = arith.constant 0.000000e+00 : f32
    %6 = vector.broadcast %cst_5 : f32 to vector<8x128xf32>
    %7 = arith.maximumf %5, %6 : vector<8x128xf32>
    %c0_6 = arith.constant 0 : index
    %c0_7 = arith.constant 0 : index
    %8 = vector.load %arg6[%c0_6, %c0_7] : memref<8x128xf32, #tpu.memory_space<vmem>>, vector<8x128xf32>
    tpu.vector_store %arg6[%c0_6, %c0_7], %7 {strides = array<i32>} : memref<8x128xf32, #tpu.memory_space<vmem>>, vector<8x128xf32>,
    %c0_8 = arith.constant 0 : index
    %c0_9 = arith.constant 0 : index
    %9 = vector.load %arg6[%c0_8, %c0_9] : memref<8x128xf32, #tpu.memory_space<vmem>>, vector<8x128xf32>
    %c0_10 = arith.constant 0 : index
    %c0_11 = arith.constant 0 : index
    %10 = vector.load %arg3[%c0_10, %c0_11] : memref<128x128xf32, #tpu.memory_space<vmem>>, vector<128x128xf32>
    %cst_12 = arith.constant dense<0.000000e+00> : vector<8x128xf32>
    %11 = tpu.matmul %9, %10, %cst_12 {dimension_numbers = #tpu.dot_dimension_numbers<[1], [0], [0], [1], [0, 0, 1, 1], [], []>} : vector<8x128xf32>, vector<128x128xf32>, vector<8x128xf32> -> vector<8x128xf32>
    %c0_13 = arith.constant 0 : index
    %c0_14 = arith.constant 0 : index
    %12 = vector.load %arg4[%c0_13, %c0_14] : memref<1x128xf32, #tpu.memory_space<vmem>>, vector<1x128xf32>
    %13 = vector.broadcast %12 : vector<1x128xf32> to vector<8x128xf32>
    %14 = arith.addf %11, %13 : vector<8x128xf32>
    %cst_15 = arith.constant 0.000000e+00 : f32
    %15 = vector.broadcast %cst_15 : f32 to vector<8x128xf32>
    %16 = arith.maximumf %14, %15 : vector<8x128xf32>
    %c0_16 = arith.constant 0 : index
    %c0_17 = arith.constant 0 : index
    %17 = vector.load %arg5[%c0_16, %c0_17] : memref<8x128xf32, #tpu.memory_space<vmem>>, vector<8x128xf32>
    tpu.vector_store %arg5[%c0_16, %c0_17], %16 {strides = array<i32>} : memref<8x128xf32, #tpu.memory_space<vmem>>, vector<8x128xf32>,
    return
  }
}

</mosaic_0001>

<llo_original>
// kernel: tpu_custom_call.1
$region0: #{tpu_custom_call.1}
  #allocation0 [shape = 'u32[]', space=smem, size = 0x4, offset = 0x4, fixed_abs, tag = 'smem constant byte address 0x4 - core index']
  #allocation1 [shape = 'u32[72,128]{1,0:T(1,128)}', space=vmem, size = 0x9000, scoped, tag = 'internal scratch']
  #allocation2 [shape = 'f32[8,128]{1,0:T(8,128)}', space=vmem, size = 0x1000, scoped, tag = 'scratch operand']
  %s0 = inlined_call_operand.hbm [shape: f32[8,32], index: 0, kind: input, shape index: {}]
  %s1 = inlined_call_operand.hbm [shape: f32[32,128], index: 1, kind: input, shape index: {}]
  %s2 = inlined_call_operand.vmem [shape: f32[1,128], index: 2, kind: input, shape index: {}]
  %s3 = inlined_call_operand.hbm [shape: f32[128,128], index: 3, kind: input, shape index: {}]
  %s4 = inlined_call_operand.vmem [shape: f32[1,128], index: 4, kind: input, shape index: {}]
  %s5 = inlined_call_operand.hbm [shape: f32[8,128], index: 5, kind: output, shape index: {}]
  %s6 = sld [smem:[#allocation0]]
  $region42: #{tpu_custom_call.1} parent=0
    _
  %s8 = ssub.s32 1, %s6
  %s9 = scalar_select 0, %s8, %s6
  $region1: #{tpu_custom_call.1} parent=0
    #allocation3 [shape = 'u8[4096]{0}', space=vmem, size = 0x1000, scoped, tag = 'input window, operand 0, single buffered']
    #allocation4 [shape = 's32[1]{0}', space=sflag, size = 0x4, scoped, tag = 'scoped memory for tpu_custom_call.1']
    #allocation5 [shape = 's32[1]{0}', space=sflag, size = 0x4, scoped, tag = 'scoped memory for tpu_custom_call.1']
    #allocation6 [shape = 'u8[16384]{0}', space=vmem, size = 0x4000, scoped, tag = 'input window, operand 1, single buffered']
    #allocation7 [shape = 's32[1]{0}', space=sflag, size = 0x4, scoped, tag = 'scoped memory for tpu_custom_call.1']
    #allocation8 [shape = 'u8[65536]{0}', space=vmem, size = 0x10000, scoped, tag = 'input window, operand 3, single buffered']
    #allocation9 [shape = 'u8[4096]{0}', space=vmem, size = 0x1000, scoped, tag = 'output window, operand 0, single buffered']
    %10 = vsyncpa [#allocation4], 0
    %11 = vsyncpa [#allocation7], 0
    %12 = vsyncpa [#allocation5], 0
    // Predicated region
    $region2: #{tpu_custom_call.1} parent=1 // pred_check
      _
    $region3: #{tpu_custom_call.1} parent=1 // pred_check_branch
      %14 = sbr.rel (0) target = $region5
    $region4: #{tpu_custom_call.1} parent=1 // pred_region
      %16 = vsyncadd [#allocation4], 0
      %s18 = sshll.u32 %s0, 4
      %s19 = int_to_ptr.hbm [resolvable:$true] %s18
      %s20 = sshll.u32 [#allocation3], 4
      %s21 = int_to_ptr.vmem [resolvable:$true] %s20
      %23 = dma.hbm_to_vmem [thread:$0]  %s19, 128, %s21, [#allocation4]
    $region5: #{tpu_custom_call.1} parent=1 // pred_fallthru
      _
    // Predicated region
    $region6: #{tpu_custom_call.1} parent=1 // pred_check
      _
    $region7: #{tpu_custom_call.1} parent=1 // pred_check_branch
      %25 = sbr.rel (0) target = $region9
    $region8: #{tpu_custom_call.1} parent=1 // pred_region
      %27 = vsyncadd [#allocation7], 0
      %s28 = sshll.u32 %s1, 4
      %s29 = int_to_ptr.hbm [resolvable:$true] %s28
      %s30 = sshll.u32 [#allocation6], 4
      %s31 = int_to_ptr.vmem [resolvable:$true] %s30
      %36 = dma.hbm_to_vmem [thread:$0]  %s29, 512, %s31, [#allocation7], 128, 128, 8
    $region9: #{tpu_custom_call.1} parent=1 // pred_fallthru
      _
    // Predicated region
    $region10: #{tpu_custom_call.1} parent=1 // pred_check
      _
    $region11: #{tpu_custom_call.1} parent=1 // pred_check_branch
      %38 = sbr.rel (0) target = $region13
    $region12: #{tpu_custom_call.1} parent=1 // pred_region
      _
    $region13: #{tpu_custom_call.1} parent=1 // pred_fallthru
      _
    // Predicated region
    $region14: #{tpu_custom_call.1} parent=1 // pred_check
      _
    $region15: #{tpu_custom_call.1} parent=1 // pred_check_branch
      %40 = sbr.rel (0) target = $region17
    $region16: #{tpu_custom_call.1} parent=1 // pred_region
      %42 = vsyncadd [#allocation7], 0
      %s43 = sshll.u32 %s3, 4
      %s44 = int_to_ptr.hbm [resolvable:$true] %s43
      %s45 = sshll.u32 [#allocation8], 4
      %s46 = int_to_ptr.vmem [resolvable:$true] %s45
      %51 = dma.hbm_to_vmem [thread:$0]  %s44, 2048, %s46, [#allocation7], 128, 128, 8
    $region17: #{tpu_custom_call.1} parent=1 // pred_fallthru
      _
    // Predicated region
    $region18: #{tpu_custom_call.1} parent=1 // pred_check
      _
    $region19: #{tpu_custom_call.1} parent=1 // pred_check_branch
      %53 = sbr.rel (0) target = $region21
    $region20: #{tpu_custom_call.1} parent=1 // pred_region
      _
    $region21: #{tpu_custom_call.1} parent=1 // pred_fallthru
      _
    // Predicated region
    $region22: #{tpu_custom_call.1} parent=1 // pred_check
      _
    $region23: #{tpu_custom_call.1} parent=1 // pred_check_branch
      %55 = sbr.rel (0) target = $region25
    $region24: #{tpu_custom_call.1} parent=1 // pred_region
      %57 = dma.done [#allocation4], 128
    $region25: #{tpu_custom_call.1} parent=1 // pred_fallthru
      _
    // Predicated region
    $region26: #{tpu_custom_call.1} parent=1 // pred_check
      _
    $region27: #{tpu_custom_call.1} parent=1 // pred_check_branch
      %59 = sbr.rel (0) target = $region29
    $region28: #{tpu_custom_call.1} parent=1 // pred_region
      %61 = dma.done [#allocation7], 512
    $region29: #{tpu_custom_call.1} parent=1 // pred_fallthru
      _
    // Predicated region
    $region30: #{tpu_custom_call.1} parent=1 // pred_check
      _
    $region31: #{tpu_custom_call.1} parent=1 // pred_check_branch
      %63 = sbr.rel (0) target = $region33
    $region32: #{tpu_custom_call.1} parent=1 // pred_region
      %65 = dma.done [#allocation7], 2048
    $region33: #{tpu_custom_call.1} parent=1 // pred_fallthru
      _
    %v66 = vld [vmem:[#allocation3] sm:$0xff]
    %v67 = vld [vmem:[#allocation6] sm:$0xff]
    %v68 = vld [vmem:[#allocation6 + $0x8] sm:$0xff]
    %v69 = vld [vmem:[#allocation6 + $0x10] sm:$0xff]
    %v70 = vld [vmem:[#allocation6 + $0x18] sm:$0xff]
    %v71 = vld [vmem:[%s2] sm:$0x1]
    %v73 = vperm.slane %v71, 0
    %vm75 = vcmask 261120
    %v77 = vsel %vm75, %v66, 0
    %79 = vmatpush.msra.mxu0 0.0
    %80 = vmatpush.msra.mxu0 0.0
    %81 = vmatpush.msra.mxu0 0.0
    %82 = vmatpush.msra.mxu0 0.0
    %83 = vmatpush.msra.mxu0 0.0
    %84 = vmatpush.msra.mxu0 0.0
    %85 = vmatpush.msra.mxu0 0.0
    %86 = vmatpush.msra.mxu0 0.0
    %87 = vmatpush.msra.mxu0 0.0
    %88 = vmatpush.msra.mxu0 0.0
    %89 = vmatpush.msra.mxu0 0.0
    %90 = vmatpush.msra.mxu0 0.0
    %91 = vmatpush.msra.mxu0 %v70
    %92 = vmatpush.msra.mxu0 %v69
    %93 = vmatpush.msra.mxu0 %v68
    %94 = vmatpush.msra.mxu0 %v67
    %95 = vmatmul.f32.gmra.mxu0 %v77
    %v96 = vpop.f32.mrf.mxu0
    %v97 = vadd.f32 %v73, %v96
    %98 = vdwg.mxu0
    %v99 = vmax.f32 %v97, 0.0
    %100 = vst [vmem:[#allocation2] sm:$0xff] %v99
    %v101 = vld [vmem:[#allocation2] sm:$0xff]
    %v102 = vld [vmem:[#allocation8] sm:$0xff]
    %v103 = vld [vmem:[#allocation8 + $0x8] sm:$0xff]
    %v104 = vld [vmem:[#allocation8 + $0x10] sm:$0xff]
    %v105 = vld [vmem:[#allocation8 + $0x18] sm:$0xff]
    %v106 = vld [vmem:[#allocation8 + $0x20] sm:$0xff]
    %v107 = vld [vmem:[#allocation8 + $0x28] sm:$0xff]
    %v108 = vld [vmem:[#allocation8 + $0x30] sm:$0xff]
    %v109 = vld [vmem:[#allocation8 + $0x38] sm:$0xff]
    %v110 = vld [vmem:[#allocation8 + $0x40] sm:$0xff]
    %v111 = vld [vmem:[#allocation8 + $0x48] sm:$0xff]
    %v112 = vld [vmem:[#allocation8 + $0x50] sm:$0xff]
    %v113 = vld [vmem:[#allocation8 + $0x58] sm:$0xff]
    %v114 = vld [vmem:[#allocation8 + $0x60] sm:$0xff]
    %v115 = vld [vmem:[#allocation8 + $0x68] sm:$0xff]
    %v116 = vld [vmem:[#allocation8 + $0x70] sm:$0xff]
    %v117 = vld [vmem:[#allocation8 + $0x78] sm:$0xff]
    %v118 = vld [vmem:[%s4] sm:$0x1]
    %v120 = vperm.slane %v118, 0
    %122 = vmatpush.msra.mxu0 %v117
    %123 = vmatpush.msra.mxu0 %v116
    %124 = vmatpush.msra.mxu0 %v115
    %125 = vmatpush.msra.mxu0 %v114
    %126 = vmatpush.msra.mxu0 %v113
    %127 = vmatpush.msra.mxu0 %v112
    %128 = vmatpush.msra.mxu0 %v111
    %129 = vmatpush.msra.mxu0 %v110
    %130 = vmatpush.msra.mxu0 %v109
    %131 = vmatpush.msra.mxu0 %v108
    %132 = vmatpush.msra.mxu0 %v107
    %133 = vmatpush.msra.mxu0 %v106
    %134 = vmatpush.msra.mxu0 %v105
    %135 = vmatpush.msra.mxu0 %v104
    %136 = vmatpush.msra.mxu0 %v103
    %137 = vmatpush.msra.mxu0 %v102
    %138 = vmatmul.f32.gmra.mxu0 %v101
    %v139 = vpop.f32.mrf.mxu0
    %v140 = vadd.f32 %v120, %v139
    %141 = vdwg.mxu0
    %v142 = vmax.f32 %v140, 0.0
    %143 = vst [vmem:[#allocation9] sm:$0xff] %v142
    // Predicated region
    $region34: #{tpu_custom_call.1} parent=1 // pred_check
      _
    $region35: #{tpu_custom_call.1} parent=1 // pred_check_branch
      %145 = sbr.rel (0) target = $region37
    $region36: #{tpu_custom_call.1} parent=1 // pred_region
      %147 = vsyncadd [#allocation5], 0
      %s149 = sshll.u32 [#allocation9], 4
      %s150 = int_to_ptr.vmem [resolvable:$true] %s149
      %s151 = sshll.u32 %s5, 4
      %s152 = int_to_ptr.hbm [resolvable:$true] %s151
      %154 = dma.vmem_to_hbm [thread:$0]  %s150, 128, %s152, [#allocation5]
    $region37: #{tpu_custom_call.1} parent=1 // pred_fallthru
      _
    // Predicated region
    $region38: #{tpu_custom_call.1} parent=1 // pred_check
      _
    $region39: #{tpu_custom_call.1} parent=1 // pred_check_branch
      %156 = sbr.rel (0) target = $region41
    $region40: #{tpu_custom_call.1} parent=1 // pred_region
      %158 = dma.done [#allocation5], 128
    $region41: #{tpu_custom_call.1} parent=1 // pred_fallthru
      _
    %159 = vsyncpa [#allocation4], 1
    %160 = vsyncpa [#allocation7], 1
    %161 = vsyncpa [#allocation5], 1

</llo_original>
